<compile_context>
chip_gen: v5e
topology: v5e:2x2
jax: 0.10.0
libtpu: 0.0.40
codegen_flags: <defaults>
</compile_context>

<pallas_src>
import numpy as np
import jax
import jax.numpy as jnp
from jax import lax
from jax.experimental import pallas as pl
from jax.experimental.pallas import tpu as pltpu

_EPS = 1e-5


# -----------------------------------------------------------------------------
# Kernel A: one HW tile of the merged reduction conv + GroupNorm statistics.
#   x_ref : [CS, tile_hw]  bf16      w_ref : [C_out, CS]  bf16 (z folded in)
#   y_ref : [C_out, tile_hw] bf16    sum_ref / sq_ref : [C_out, 1] f32 (accum)
# -----------------------------------------------------------------------------
def _matmul_stats_kernel(x_ref, w_ref, y_ref, sum_ref, sq_ref):
    t = pl.program_id(1)
    y = jnp.dot(w_ref[...], x_ref[...], preferred_element_type=jnp.float32)
    y_ref[...] = y.astype(y_ref.dtype)

    @pl.when(t == 0)
    def _init():
        sum_ref[...] = jnp.zeros_like(sum_ref)
        sq_ref[...] = jnp.zeros_like(sq_ref)

    sum_ref[...] += jnp.sum(y, axis=1, keepdims=True)
    sq_ref[...] += jnp.sum(y * y, axis=1, keepdims=True)


# -----------------------------------------------------------------------------
# Kernel B: GroupNorm affine + conv bias + ReLU collapsed to one FMA.
#   out = relu(y * scale + shift)
# -----------------------------------------------------------------------------
def _norm_relu_kernel(y_ref, scale_ref, shift_ref, out_ref):
    y = y_ref[...].astype(jnp.float32)
    out_ref[...] = jnp.maximum(y * scale_ref[...] + shift_ref[...], 0.0)


# -----------------------------------------------------------------------------
# HW tile size: derived per generation from the chip's VMEM, with headroom for
# double buffering + compiler scratch, rounded to a multiple of 128 lanes.
# -----------------------------------------------------------------------------
def _pick_tile_hw(HW, CS, C_out, max_tile_hw=None):
    try:
        vmem_bytes = pltpu.get_tpu_info().vmem_capacity_bytes
    except Exception:
        vmem_bytes = 64 * 1024 * 1024          # conservative (v7x per-TC VMEM)
    budget = vmem_bytes // 4                   # headroom: double buffers, scratch
    # bytes per HW column: x (bf16, 2 bufs) + y (bf16, 2 bufs) + out (f32, 2 bufs)
    per_col = 2 * 2 * CS + 2 * 2 * C_out + 2 * 4 * C_out
    cap = max(128, budget // per_col)
    if max_tile_hw is not None:
        cap = min(cap, max_tile_hw)
    if HW <= cap:
        return HW
    t = (cap // 128) * 128
    while t >= 128 and HW % t:
        t -= 128
    if t >= 128:
        return t
    return HW   # TODO(synk): pad/mask a ragged trailing tile instead.


# -----------------------------------------------------------------------------
# Forward
# -----------------------------------------------------------------------------
def task_decomposition_forward(feat_list, params, num_groups=32, max_tile_hw=None):
    S = len(feat_list)
    B, C_in, H, W = feat_list[0].shape
    HW = H * W
    CS = C_in * S
    C_out = params["br"].shape[0]
    assert C_out % num_groups == 0
    cg = C_out // num_groups

    # Single [B, CS, HW] bf16 slab (TOOD concatenates upstream; bf16 halves reads).
    x = jnp.concatenate([f.reshape(B, C_in, HW) for f in feat_list], axis=1)
    x = x.astype(jnp.bfloat16)

    # ---- adaptive_avg_pool(1,1) + layer-attention MLP (tiny; precedes matmul) ----
    avg = jnp.mean(x, axis=2, dtype=jnp.float32)                      # [B, CS]
    h = jax.nn.relu(avg @ params["w1"].T + params["b1"])              # [B, M]
    z = jax.nn.sigmoid(h @ params["w2"].T + params["b2"])             # [B, S]
    # Fold z into per-batch reduction weights (per-sample attention, exact for any B).
    col_scale = jnp.repeat(z, C_in, axis=1)                           # [B, CS]
    w_scaled = (params["wr"][None] * col_scale[:, None, :]).astype(jnp.bfloat16)

    tile_hw = _pick_tile_hw(HW, CS, C_out, max_tile_hw)
    n_t = HW // tile_hw

    # ---- pass 1: streamed matmul + per-channel sum / sumsq -------------------
    y_raw, csum, csq = pl.pallas_call(
        _matmul_stats_kernel,
        out_shape=(jax.ShapeDtypeStruct((B, C_out, HW), jnp.bfloat16),
                   jax.ShapeDtypeStruct((B, C_out, 1), jnp.float32),
                   jax.ShapeDtypeStruct((B, C_out, 1), jnp.float32)),
        grid=(B, n_t),
        in_specs=[
            pl.BlockSpec((pl.Squeezed(), CS, tile_hw), lambda b, t: (b, 0, t)),
            pl.BlockSpec((pl.Squeezed(), C_out, CS), lambda b, t: (b, 0, 0)),
        ],
        out_specs=(
            pl.BlockSpec((pl.Squeezed(), C_out, tile_hw), lambda b, t: (b, 0, t)),
            pl.BlockSpec((pl.Squeezed(), C_out, 1), lambda b, t: (b, 0, 0)),
            pl.BlockSpec((pl.Squeezed(), C_out, 1), lambda b, t: (b, 0, 0)),
        ),
        compiler_params=pltpu.CompilerParams(
            dimension_semantics=("parallel", "arbitrary")),
    )(x, w_scaled)

    # ---- GroupNorm stats -> per-channel scale/shift (tiny, pure JAX) ---------
    br, gamma, beta = params["br"], params["gamma"], params["beta"]
    csum = csum[..., 0]                                               # [B, C_out]
    csq = csq[..., 0]
    tot = csum + HW * br[None, :]                                     # Σ (y + br)
    tot2 = csq + 2.0 * br[None, :] * csum + HW * (br ** 2)[None, :]   # Σ (y + br)^2
    n_elem = float(cg * HW)
    mean_g = tot.reshape(B, num_groups, cg).sum(-1) / n_elem          # [B, G]
    ex2_g = tot2.reshape(B, num_groups, cg).sum(-1) / n_elem
    var_g = ex2_g - mean_g * mean_g                                   # biased (torch GN)
    inv_g = lax.rsqrt(var_g + _EPS)
    mean_c = jnp.repeat(mean_g, cg, axis=1)                           # [B, C_out]
    inv_c = jnp.repeat(inv_g, cg, axis=1)
    scale = (inv_c * gamma[None, :])[..., None]                       # [B, C_out, 1]
    shift = ((br[None, :] - mean_c) * inv_c * gamma[None, :] + beta[None, :])[..., None]

    # ---- pass 2: normalize + ReLU (fully parallel) ----------------------------
    out = pl.pallas_call(
        _norm_relu_kernel,
        out_shape=jax.ShapeDtypeStruct((B, C_out, HW), jnp.float32),
        grid=(B, n_t),
        in_specs=[
            pl.BlockSpec((pl.Squeezed(), C_out, tile_hw), lambda b, t: (b, 0, t)),
            pl.BlockSpec((pl.Squeezed(), C_out, 1), lambda b, t: (b, 0, 0)),
            pl.BlockSpec((pl.Squeezed(), C_out, 1), lambda b, t: (b, 0, 0)),
        ],
        out_specs=pl.BlockSpec((pl.Squeezed(), C_out, tile_hw), lambda b, t: (b, 0, t)),
        compiler_params=pltpu.CompilerParams(
            dimension_semantics=("parallel", "parallel")),
    )(y_raw, scale, shift)

    return out.reshape(B, C_out, H, W)


# -----------------------------------------------------------------------------
# Parameter init (matches nn.Module.__init__: conv weights ~ N(0, 0.01),
# conv biases = 0, GroupNorm gamma = 1, beta = 0).
# -----------------------------------------------------------------------------
def init_params(key, feat_channels, stacked_convs, la_down_rate=8):
    C = feat_channels
    S = stacked_convs
    CS = C * S
    M = CS // la_down_rate
    k1, k2, k3 = jax.random.split(key, 3)
    return {
        "w1": 0.01 * jax.random.normal(k1, (M, CS), jnp.float32),     # la_conv1
        "b1": jnp.zeros((M,), jnp.float32),
        "w2": 0.01 * jax.random.normal(k2, (S, M), jnp.float32),      # la_conv2
        "b2": jnp.zeros((S,), jnp.float32),
        "wr": 0.01 * jax.random.normal(k3, (C, CS), jnp.float32),     # reduction_conv
        "br": jnp.zeros((C,), jnp.float32),
        "gamma": jnp.ones((C,), jnp.float32),
        "beta": jnp.zeros((C,), jnp.float32),
    }


# Pure-JAX f32 reference mirroring the PyTorch forward (intended per-sample
# attention; the literal PyTorch broadcast `feat * weight[:, i]` is only
# well-defined for B == 1).
def reference_forward(feat_list, params, num_groups=32):
    S = len(feat_list)
    feat = jnp.concatenate(feat_list, axis=1)                         # [B, CS, H, W]
    avg = feat.mean(axis=(2, 3))                                      # [B, CS]
    h = jax.nn.relu(avg @ params["w1"].T + params["b1"])
    z = jax.nn.sigmoid(h @ params["w2"].T + params["b2"])             # [B, S]
    task = jnp.concatenate(
        [feat_list[i] * z[:, i][:, None, None, None] for i in range(S)], axis=1)
    y = jnp.einsum("bihw,oi->bohw", task, params["wr"]) \
        + params["br"][None, :, None, None]
    B, C, H, W = y.shape
    cg = C // num_groups
    yg = y.reshape(B, num_groups, cg * H * W)
    mean = yg.mean(axis=2, keepdims=True)
    var = yg.var(axis=2, keepdims=True)
    yn = ((yg - mean) * lax.rsqrt(var + _EPS)).reshape(B, C, H, W)
    yn = yn * params["gamma"][None, :, None, None] + params["beta"][None, :, None, None]
    return jnp.maximum(yn, 0.0)


if __name__ == "__main__":
    feat_channels, stacked_convs, la_down_rate, num_groups = 64, 4, 8, 32
    B, H, W = 2, 32, 32

    key = jax.random.PRNGKey(0)
    pkey, xkey = jax.random.split(key)
    params = init_params(pkey, feat_channels, stacked_convs, la_down_rate)
    xkeys = jax.random.split(xkey, stacked_convs)
    feat_list = [jax.random.normal(k, (B, feat_channels, H, W), jnp.float32)
                 for k in xkeys]

    # max_tile_hw=256 forces a 4-step HW pipeline at demo shapes so the tiled /
    # accumulated-stats path is exercised; leave None in production (auto-sized).
    out = jax.block_until_ready(
        task_decomposition_forward(feat_list, params, num_groups, max_tile_hw=256))
    ref = jax.block_until_ready(reference_forward(feat_list, params, num_groups))

    assert out.shape == (B, feat_channels, H, W)
    np.testing.assert_allclose(np.asarray(out), np.asarray(ref), rtol=0.0, atol=5e-2)
    print("KERNEL_OK")
</pallas_src>

<mosaic_0001>
module attributes {stable_mosaic.version = 11 : i64} {
  func.func @_matmul_stats_kernel(%arg0: i32, %arg1: i32, %arg2: memref<1x256x256xbf16, #tpu.memory_space<vmem>>, %arg3: memref<1x64x256xbf16, #tpu.memory_space<vmem>>, %arg4: memref<1x64x256xbf16, #tpu.memory_space<vmem>>, %arg5: memref<1x64x1xf32, #tpu.memory_space<vmem>>, %arg6: memref<1x64x1xf32, #tpu.memory_space<vmem>>) attributes {dimension_semantics = [#tpu.dimension_semantics<parallel>, #tpu.dimension_semantics<arbitrary>], iteration_bounds = array<i64: 2, 4>, scalar_prefetch = 0 : i64, scratch_operands = 0 : i64, tpu.core_type = #tpu.core_type<tc>, window_params = [{transform_indices = @transform_0, window_bounds = array<i64: 1, 256, 256>}, {transform_indices = @transform_1, window_bounds = array<i64: 1, 64, 256>}, {transform_indices = @transform_2, window_bounds = array<i64: 1, 64, 256>}, {transform_indices = @transform_3, window_bounds = array<i64: 1, 64, 1>}, {transform_indices = @transform_4, window_bounds = array<i64: 1, 64, 1>}]} {
    %c0 = arith.constant 0 : index
    %c0_0 = arith.constant 0 : index
    %c0_1 = arith.constant 0 : index
    %0 = vector.load %arg3[%c0, %c0_0, %c0_1] : memref<1x64x256xbf16, #tpu.memory_space<vmem>>, vector<1x64x256xbf16>
    %1 = vector.shape_cast %0 : vector<1x64x256xbf16> to vector<64x256xbf16>
    %c0_2 = arith.constant 0 : index
    %c0_3 = arith.constant 0 : index
    %c0_4 = arith.constant 0 : index
    %2 = vector.load %arg2[%c0_2, %c0_3, %c0_4] : memref<1x256x256xbf16, #tpu.memory_space<vmem>>, vector<1x256x256xbf16>
    %3 = vector.shape_cast %2 : vector<1x256x256xbf16> to vector<256x256xbf16>
    %cst = arith.constant dense<0.000000e+00> : vector<64x256xf32>
    %4 = tpu.matmul %1, %3, %cst {dimension_numbers = #tpu.dot_dimension_numbers<[1], [0], [0], [1], [0, 0, 1, 1], [], []>} : vector<64x256xbf16>, vector<256x256xbf16>, vector<64x256xf32> -> vector<64x256xf32>
    %5 = arith.truncf %4 : vector<64x256xf32> to vector<64x256xbf16>
    %c0_5 = arith.constant 0 : index
    %c0_6 = arith.constant 0 : index
    %c0_7 = arith.constant 0 : index
    %6 = vector.load %arg4[%c0_5, %c0_6, %c0_7] : memref<1x64x256xbf16, #tpu.memory_space<vmem>>, vector<1x64x256xbf16>
    %7 = vector.shape_cast %6 : vector<1x64x256xbf16> to vector<64x256xbf16>
    %8 = vector.shape_cast %5 : vector<64x256xbf16> to vector<1x64x256xbf16>
    tpu.vector_store %arg4[%c0_5, %c0_6, %c0_7], %8 {strides = array<i32>} : memref<1x64x256xbf16, #tpu.memory_space<vmem>>, vector<1x64x256xbf16>,
    %c0_i32 = arith.constant 0 : i32
    %9 = arith.cmpi eq, %arg1, %c0_i32 : i32
    %10 = arith.extui %9 : i1 to i32
    %c0_i32_8 = arith.constant 0 : i32
    %11 = arith.cmpi ne, %10, %c0_i32_8 : i32
    scf.if %11 {
      %cst_23 = arith.constant 0.000000e+00 : f32
      %29 = vector.broadcast %cst_23 : f32 to vector<64x1xf32>
      %c0_24 = arith.constant 0 : index
      %c0_25 = arith.constant 0 : index
      %c0_26 = arith.constant 0 : index
      %30 = vector.load %arg5[%c0_24, %c0_25, %c0_26] : memref<1x64x1xf32, #tpu.memory_space<vmem>>, vector<1x64x1xf32>
      %31 = vector.shape_cast %30 : vector<1x64x1xf32> to vector<64x1xf32>
      %32 = vector.shape_cast %29 : vector<64x1xf32> to vector<1x64x1xf32>
      tpu.vector_store %arg5[%c0_24, %c0_25, %c0_26], %32 {strides = array<i32>} : memref<1x64x1xf32, #tpu.memory_space<vmem>>, vector<1x64x1xf32>,
      %cst_27 = arith.constant 0.000000e+00 : f32
      %33 = vector.broadcast %cst_27 : f32 to vector<64x1xf32>
      %c0_28 = arith.constant 0 : index
      %c0_29 = arith.constant 0 : index
      %c0_30 = arith.constant 0 : index
      %34 = vector.load %arg6[%c0_28, %c0_29, %c0_30] : memref<1x64x1xf32, #tpu.memory_space<vmem>>, vector<1x64x1xf32>
      %35 = vector.shape_cast %34 : vector<1x64x1xf32> to vector<64x1xf32>
      %36 = vector.shape_cast %33 : vector<64x1xf32> to vector<1x64x1xf32>
      tpu.vector_store %arg6[%c0_28, %c0_29, %c0_30], %36 {strides = array<i32>} : memref<1x64x1xf32, #tpu.memory_space<vmem>>, vector<1x64x1xf32>,
    } else {
    }
    %c0_9 = arith.constant 0 : index
    %c0_10 = arith.constant 0 : index
    %c0_11 = arith.constant 0 : index
    %12 = vector.load %arg5[%c0_9, %c0_10, %c0_11] : memref<1x64x1xf32, #tpu.memory_space<vmem>>, vector<1x64x1xf32>
    %13 = vector.shape_cast %12 : vector<1x64x1xf32> to vector<64x1xf32>
    %cst_12 = arith.constant dense<0.000000e+00> : vector<64xf32>
    %14 = vector.multi_reduction <add>, %4, %cst_12 [1] : vector<64x256xf32> to vector<64xf32>
    %15 = vector.shape_cast %14 : vector<64xf32> to vector<64x1xf32>
    %16 = arith.addf %13, %15 : vector<64x1xf32>
    %c0_13 = arith.constant 0 : index
    %c0_14 = arith.constant 0 : index
    %c0_15 = arith.constant 0 : index
    %17 = vector.load %arg5[%c0_13, %c0_14, %c0_15] : memref<1x64x1xf32, #tpu.memory_space<vmem>>, vector<1x64x1xf32>
    %18 = vector.shape_cast %17 : vector<1x64x1xf32> to vector<64x1xf32>
    %19 = vector.shape_cast %16 : vector<64x1xf32> to vector<1x64x1xf32>
    tpu.vector_store %arg5[%c0_13, %c0_14, %c0_15], %19 {strides = array<i32>} : memref<1x64x1xf32, #tpu.memory_space<vmem>>, vector<1x64x1xf32>,
    %c0_16 = arith.constant 0 : index
    %c0_17 = arith.constant 0 : index
    %c0_18 = arith.constant 0 : index
    %20 = vector.load %arg6[%c0_16, %c0_17, %c0_18] : memref<1x64x1xf32, #tpu.memory_space<vmem>>, vector<1x64x1xf32>
    %21 = vector.shape_cast %20 : vector<1x64x1xf32> to vector<64x1xf32>
    %22 = arith.mulf %4, %4 : vector<64x256xf32>
    %cst_19 = arith.constant dense<0.000000e+00> : vector<64xf32>
    %23 = vector.multi_reduction <add>, %22, %cst_19 [1] : vector<64x256xf32> to vector<64xf32>
    %24 = vector.shape_cast %23 : vector<64xf32> to vector<64x1xf32>
    %25 = arith.addf %21, %24 : vector<64x1xf32>
    %c0_20 = arith.constant 0 : index
    %c0_21 = arith.constant 0 : index
    %c0_22 = arith.constant 0 : index
    %26 = vector.load %arg6[%c0_20, %c0_21, %c0_22] : memref<1x64x1xf32, #tpu.memory_space<vmem>>, vector<1x64x1xf32>
    %27 = vector.shape_cast %26 : vector<1x64x1xf32> to vector<64x1xf32>
    %28 = vector.shape_cast %25 : vector<64x1xf32> to vector<1x64x1xf32>
    tpu.vector_store %arg6[%c0_20, %c0_21, %c0_22], %28 {strides = array<i32>} : memref<1x64x1xf32, #tpu.memory_space<vmem>>, vector<1x64x1xf32>,
    return
  }
  func.func @transform_0(%arg0: i32, %arg1: i32) -> (i32, i32, i32) {
    %c0_i32 = arith.constant 0 : i32
    %c0_i32_0 = arith.constant 0 : i32
    return %arg0, %c0_i32, %arg1 : i32, i32, i32
  }
  func.func @transform_1(%arg0: i32, %arg1: i32) -> (i32, i32, i32) {
    %c0_i32 = arith.constant 0 : i32
    %c0_i32_0 = arith.constant 0 : i32
    %c0_i32_1 = arith.constant 0 : i32
    return %arg0, %c0_i32, %c0_i32_0 : i32, i32, i32
  }
  func.func @transform_2(%arg0: i32, %arg1: i32) -> (i32, i32, i32) {
    %c0_i32 = arith.constant 0 : i32
    %c0_i32_0 = arith.constant 0 : i32
    return %arg0, %c0_i32, %arg1 : i32, i32, i32
  }
  func.func @transform_3(%arg0: i32, %arg1: i32) -> (i32, i32, i32) {
    %c0_i32 = arith.constant 0 : i32
    %c0_i32_0 = arith.constant 0 : i32
    %c0_i32_1 = arith.constant 0 : i32
    return %arg0, %c0_i32, %c0_i32_0 : i32, i32, i32
  }
  func.func @transform_4(%arg0: i32, %arg1: i32) -> (i32, i32, i32) {
    %c0_i32 = arith.constant 0 : i32
    %c0_i32_0 = arith.constant 0 : i32
    %c0_i32_1 = arith.constant 0 : i32
    return %arg0, %c0_i32, %c0_i32_0 : i32, i32, i32
  }
}

</mosaic_0001>

<llo_original>
// kernel: tpu_custom_call.1
$region0: #{tpu_custom_call.1}
  #allocation0 [shape = 'u32[]', space=smem, size = 0x4, offset = 0x4, fixed_abs, tag = 'smem constant byte address 0x4 - core index']
  #allocation1 [shape = 'u32[72,128]{1,0:T(1,128)}', space=vmem, size = 0x9000, scoped, tag = 'internal scratch']
  %s0 = inlined_call_operand.hbm [shape: bf16[2,256,1024], index: 0, kind: input, shape index: {}]
  %s1 = inlined_call_operand.hbm [shape: bf16[2,64,256], index: 1, kind: input, shape index: {}]
  %s2 = inlined_call_operand.hbm [shape: bf16[2,64,1024], index: 2, kind: output, shape index: {0}]
  %s3 = inlined_call_operand.vmem [shape: f32[2,64,1], index: 3, kind: output, shape index: {1}]
  %s4 = inlined_call_operand.vmem [shape: f32[2,64,1], index: 4, kind: output, shape index: {2}]
  %5 = xla_tuple %s2, %s3, %s4
  %s6 = sld [smem:[#allocation0]]
  $region69: #{tpu_custom_call.1} parent=0
    _
  %s8 = ssub.s32 1, %s6
  %s9 = scalar_select 0, %s8, %s6
  $region1: #{tpu_custom_call.1} parent=0
    #allocation2 [shape = 'u8[262144]{0}', space=vmem, size = 0x40000, scoped, tag = 'input window, operand 0']
    #allocation3 [shape = 's32[2]{0}', space=sflag, size = 0x8, scoped, tag = 'scoped memory for tpu_custom_call.1']
    #allocation4 [shape = 's32[2]{0}', space=sflag, size = 0x8, scoped, tag = 'scoped memory for tpu_custom_call.1']
    #allocation5 [shape = 'u8[65536]{0}', space=vmem, size = 0x10000, scoped, tag = 'input window, operand 1']
    #allocation6 [shape = 's32[2]{0}', space=sflag, size = 0x8, scoped, tag = 'scoped memory for tpu_custom_call.1']
    #allocation7 [shape = 'u8[65536]{0}', space=vmem, size = 0x10000, scoped, tag = 'output window, operand 0']
    %10 = vsyncpa [#allocation3], 0
    %s11 = scalar_lea.sflag [#allocation3], 1
    %12 = vsyncpa %s11, 0
    %13 = vsyncpa [#allocation6], 0
    %s14 = scalar_lea.sflag [#allocation6], 1
    %15 = vsyncpa %s14, 0
    %16 = vsyncpa [#allocation4], 0
    %s17 = scalar_lea.sflag [#allocation4], 1
    %18 = vsyncpa %s17, 0
    loop: start=0, step=1, limit=10
    $region2: #{tpu_custom_call.1} parent=1 // loop_pre_header
      _
    $region3: #{tpu_custom_call.1} parent=1 // loop_header
      %s20 = sphi 0, %s24
      %p21 = scmp.ge.s32.totalorder %s20, 10
      %s27 = sphi 0, %s39
      %s28 = sphi 0, %s35
      %s29 = sphi 0, %s27
      %s30 = sphi 0, %s28
      %s31 = sphi 0, %s29
      %s32 = sphi 0, %s30
      %s44 = sphi 0, %s46
      %s47 = sphi 0, %s44
      %s48 = sphi 0, %s47
      %s64 = sphi 0, %s48
      %s70 = sphi 0, %s72
      %s73 = sphi 0, %s70
      %s74 = sphi 0, %s73
      %s90 = sphi 0, %s74
      %s98 = sphi 0, %s100
      %s101 = sphi 0, %s98
      %s102 = sphi 0, %s101
      %s118 = sphi 0, %s102
      %s124 = sphi 0, %s126
      %s127 = sphi 0, %s124
      %s128 = sphi 0, %s127
      %s144 = sphi 0, %s128
      %s150 = sphi 0, %s152
      %s153 = sphi 0, %s150
      %s154 = sphi 0, %s153
      %s170 = sphi 0, %s154
    $region4: #{tpu_custom_call.1} parent=1 // loop_header_branch
      %23 = sbr.rel (%p21) target = $region8
    $region5: #{tpu_custom_call.1} parent=1 // loop_body
      %s25 = ssub.s32 %s20, 1
      %s26 = ssub.s32 %s20, 2
      %s33 = sadd.s32 1, %s28
      %p34 = scmp.ge.s32.totalorder %s33, 4
      %s35 = scalar_select %p34, 0, %s33
      %s36 = sadd.s32 1, %s27
      %s37 = scalar_select %p34, %s36, %s27
      %p38 = scmp.ge.s32.totalorder %s37, 2
      %s39 = scalar_select %p38, 0, %s37
      %s40 = ssub.s32 %s27, %s39
      %s41 = ssub.s32 %s28, %s35
      %s42 = sor.u32 %s40, %s41
      %p43 = scmp.eq.s32.totalorder %s42, 0
      %s45 = sadd.s32 %s44, 1
      %s46 = scalar_select %p43, %s44, %s45
      %p49 = pneg %p43
      %p50 = scmp.eq.s32.totalorder %s20, 7
      %p51 = por %p49, %p50
      %p52 = scmp.ne.s32.totalorder %s44, %s47
      %p53 = scmp.eq.s32.totalorder %s20, 0
      %p54 = por %p52, %p53
      %p55 = scmp.ne.s32.totalorder %s44, %s47
      %p56 = scmp.eq.s32.totalorder %s25, 7
      %p57 = por %p55, %p56
      %p58 = scmp.ne.s32.totalorder %s47, %s48
      %p59 = scmp.eq.s32.totalorder %s25, 0
      %p60 = por %p58, %p59
      %p61 = scmp.ne.s32.totalorder %s47, %s48
      %p62 = scmp.eq.s32.totalorder %s26, 7
      %p63 = por %p61, %p62
      %p65 = scmp.ne.s32.totalorder %s48, %s64
      %p66 = scmp.eq.s32.totalorder %s26, 0
      %p67 = por %p65, %p66
      %s68 = ssub.s32 %s27, %s39
      %p69 = scmp.eq.s32.totalorder %s68, 0
      %s71 = sadd.s32 %s70, 1
      %s72 = scalar_select %p69, %s70, %s71
      %p75 = pneg %p69
      %p76 = scmp.eq.s32.totalorder %s20, 7
      %p77 = por %p75, %p76
      %p78 = scmp.ne.s32.totalorder %s70, %s73
      %p79 = scmp.eq.s32.totalorder %s20, 0
      %p80 = por %p78, %p79
      %p81 = scmp.ne.s32.totalorder %s70, %s73
      %p82 = scmp.eq.s32.totalorder %s25, 7
      %p83 = por %p81, %p82
      %p84 = scmp.ne.s32.totalorder %s73, %s74
      %p85 = scmp.eq.s32.totalorder %s25, 0
      %p86 = por %p84, %p85
      %p87 = scmp.ne.s32.totalorder %s73, %s74
      %p88 = scmp.eq.s32.totalorder %s26, 7
      %p89 = por %p87, %p88
      %p91 = scmp.ne.s32.totalorder %s74, %s90
      %p92 = scmp.eq.s32.totalorder %s26, 0
      %p93 = por %p91, %p92
      %s94 = ssub.s32 %s27, %s39
      %s95 = ssub.s32 %s28, %s35
      %s96 = sor.u32 %s94, %s95
      %p97 = scmp.eq.s32.totalorder %s96, 0
      %s99 = sadd.s32 %s98, 1
      %s100 = scalar_select %p97, %s98, %s99
      %p103 = pneg %p97
      %p104 = scmp.eq.s32.totalorder %s20, 7
      %p105 = por %p103, %p104
      %p106 = scmp.ne.s32.totalorder %s98, %s101
      %p107 = scmp.eq.s32.totalorder %s20, 0
      %p108 = por %p106, %p107
      %p109 = scmp.ne.s32.totalorder %s98, %s101
      %p110 = scmp.eq.s32.totalorder %s25, 7
      %p111 = por %p109, %p110
      %p112 = scmp.ne.s32.totalorder %s101, %s102
      %p113 = scmp.eq.s32.totalorder %s25, 0
      %p114 = por %p112, %p113
      %p115 = scmp.ne.s32.totalorder %s101, %s102
      %p116 = scmp.eq.s32.totalorder %s26, 7
      %p117 = por %p115, %p116
      %p119 = scmp.ne.s32.totalorder %s102, %s118
      %p120 = scmp.eq.s32.totalorder %s26, 0
      %p121 = por %p119, %p120
      %s122 = ssub.s32 %s27, %s39
      %p123 = scmp.eq.s32.totalorder %s122, 0
      %s125 = sadd.s32 %s124, 1
      %s126 = scalar_select %p123, %s124, %s125
      %p129 = pneg %p123
      %p130 = scmp.eq.s32.totalorder %s20, 7
      %p131 = por %p129, %p130
      %p132 = scmp.ne.s32.totalorder %s124, %s127
      %p133 = scmp.eq.s32.totalorder %s20, 0
      %p134 = por %p132, %p133
      %p135 = scmp.ne.s32.totalorder %s124, %s127
      %p136 = scmp.eq.s32.totalorder %s25, 7
      %p137 = por %p135, %p136
      %p138 = scmp.ne.s32.totalorder %s127, %s128
      %p139 = scmp.eq.s32.totalorder %s25, 0
      %p140 = por %p138, %p139
      %p141 = scmp.ne.s32.totalorder %s127, %s128
      %p142 = scmp.eq.s32.totalorder %s26, 7
      %p143 = por %p141, %p142
      %p145 = scmp.ne.s32.totalorder %s128, %s144
      %p146 = scmp.eq.s32.totalorder %s26, 0
      %p147 = por %p145, %p146
      %s148 = ssub.s32 %s27, %s39
      %p149 = scmp.eq.s32.totalorder %s148, 0
      %s151 = sadd.s32 %s150, 1
      %s152 = scalar_select %p149, %s150, %s151
      %p155 = pneg %p149
      %p156 = scmp.eq.s32.totalorder %s20, 7
      %p157 = por %p155, %p156
      %p158 = scmp.ne.s32.totalorder %s150, %s153
      %p159 = scmp.eq.s32.totalorder %s20, 0
      %p160 = por %p158, %p159
      %p161 = scmp.ne.s32.totalorder %s150, %s153
      %p162 = scmp.eq.s32.totalorder %s25, 7
      %p163 = por %p161, %p162
      %p164 = scmp.ne.s32.totalorder %s153, %s154
      %p165 = scmp.eq.s32.totalorder %s25, 0
      %p166 = por %p164, %p165
      %p167 = scmp.ne.s32.totalorder %s153, %s154
      %p168 = scmp.eq.s32.totalorder %s26, 7
      %p169 = por %p167, %p168
      %p171 = scmp.ne.s32.totalorder %s154, %s170
      %p172 = scmp.eq.s32.totalorder %s26, 0
      %p173 = por %p171, %p172
      %p174 = scmp.le.s32.totalorder 1, %s20
      %p175 = scmp.lt.s32.totalorder %s20, 9
      %p176 = pnand %p174, %p175
      %p177 = pneg %p176
      // Predicated region
      $region9: #{tpu_custom_call.1} parent=5 // pred_check
        _
      $region10: #{tpu_custom_call.1} parent=5 // pred_check_branch
        %179 = sbr.rel (%p176) target = $region12
      $region11: #{tpu_custom_call.1} parent=5 // pred_region
        %s180 = ssub.s32 %s20, 1
      $region12: #{tpu_custom_call.1} parent=5 // pred_fallthru
        _
      %p181 = scmp.lt.s32.totalorder %s20, 8
      // Predicated region
      $region13: #{tpu_custom_call.1} parent=5 // pred_check
        %p182 = pneg %p181
      $region14: #{tpu_custom_call.1} parent=5 // pred_check_branch
        %184 = sbr.rel (%p182) target = $region16
      $region15: #{tpu_custom_call.1} parent=5 // pred_region
        // Predicated region
        $region17: #{tpu_custom_call.1} parent=15 // pred_check
          %p185 = pneg %p54
        $region18: #{tpu_custom_call.1} parent=15 // pred_check_branch
          %187 = sbr.rel (%p185) target = $region20
        $region19: #{tpu_custom_call.1} parent=15 // pred_region
          %s188 = sand.u32 %s44, 1
          %s189 = scalar_lea.sflag [#allocation3], %s188
          %s190 = sand.u32 %s44, 1
          %s191 = smul.addr %s190, 256
          %s192 = scalar_lea.vmem [#allocation2], %s191
          %s193 = smul.u32 2, %s28
          %195 = vsyncadd %s189, 0
          %s196 = smul.addr %s27, 256
          %s197 = sadd.s32 %s193, %s196
          %s198 = smul.addr %s197, 4
          %s199 = scalar_lea.hbm %s0, %s198
          %s200 = sshll.u32 %s199, 4
          %s201 = int_to_ptr.hbm [resolvable:$true] %s200
          %s202 = sshll.u32 %s192, 4
          %s203 = int_to_ptr.vmem [resolvable:$true] %s202
          %208 = dma.hbm_to_vmem [thread:$0]  %s201, 4096, %s203, %s189, 512, 128, 8
        $region20: #{tpu_custom_call.1} parent=15 // pred_fallthru
          _
        // Predicated region
        $region21: #{tpu_custom_call.1} parent=15 // pred_check
          %p209 = pneg %p80
        $region22: #{tpu_custom_call.1} parent=15 // pred_check_branch
          %211 = sbr.rel (%p209) target = $region24
        $region23: #{tpu_custom_call.1} parent=15 // pred_region
          %s212 = sand.u32 %s70, 1
          %s213 = scalar_lea.sflag [#allocation6], %s212
          %s214 = sand.u32 %s70, 1
          %s215 = smul.addr %s214, 64
          %s216 = scalar_lea.vmem [#allocation5], %s215
          %218 = vsyncadd %s213, 0
          %s219 = smul.addr %s27, 16
          %s220 = smul.addr %s219, 4
          %s221 = scalar_lea.hbm %s1, %s220
          %s222 = sshll.u32 %s221, 4
          %s223 = int_to_ptr.hbm [resolvable:$true] %s222
          %s224 = sshll.u32 %s216, 4
          %s225 = int_to_ptr.vmem [resolvable:$true] %s224
          %230 = dma.hbm_to_vmem [thread:$0]  %s223, 1024, %s225, %s213, 128, 128, 8
        $region24: #{tpu_custom_call.1} parent=15 // pred_fallthru
          _
      $region16: #{tpu_custom_call.1} parent=5 // pred_fallthru
        _
      %p231 = scmp.le.s32.totalorder 1, %s20
      %p232 = scmp.lt.s32.totalorder %s20, 9
      %p233 = pnand %p231, %p232
      %p234 = pneg %p233
      // Predicated region
      $region25: #{tpu_custom_call.1} parent=5 // pred_check
        _
      $region26: #{tpu_custom_call.1} parent=5 // pred_check_branch
        %236 = sbr.rel (%p233) target = $region28
      $region27: #{tpu_custom_call.1} parent=5 // pred_region
        %s237 = ssub.s32 %s20, 1
        %s238 = sand.u32 %s47, 1
        %s239 = scalar_lea.sflag [#allocation3], %s238
        %s240 = sand.u32 %s47, 1
        %s241 = smul.addr %s240, 256
        %s242 = scalar_lea.vmem [#allocation2], %s241
        // Predicated region
        $region29: #{tpu_custom_call.1} parent=27 // pred_check
          %p243 = pneg %p60
        $region30: #{tpu_custom_call.1} parent=27 // pred_check_branch
          %245 = sbr.rel (%p243) target = $region32
        $region31: #{tpu_custom_call.1} parent=27 // pred_region
          %247 = dma.done %s239, 4096
        $region32: #{tpu_custom_call.1} parent=27 // pred_fallthru
          _
        %s248 = sand.u32 %s73, 1
        %s249 = scalar_lea.sflag [#allocation6], %s248
        %s250 = sand.u32 %s73, 1
        %s251 = smul.addr %s250, 64
        %s252 = scalar_lea.vmem [#allocation5], %s251
        // Predicated region
        $region33: #{tpu_custom_call.1} parent=27 // pred_check
          %p253 = pneg %p86
        $region34: #{tpu_custom_call.1} parent=27 // pred_check_branch
          %255 = sbr.rel (%p253) target = $region36
        $region35: #{tpu_custom_call.1} parent=27 // pred_region
          %257 = dma.done %s249, 1024
        $region36: #{tpu_custom_call.1} parent=27 // pred_fallthru
          _
        %s258 = sand.u32 %s47, 1
        %s259 = scalar_lea.sflag [#allocation3], %s258
        %s260 = sand.u32 %s47, 1
        %s261 = smul.addr %s260, 256
        %s262 = scalar_lea.vmem [#allocation2], %s261
        %p263 = pneg %p60
        %p264 = pneg %p57
        %s265 = sand.u32 %s73, 1
        %s266 = scalar_lea.sflag [#allocation6], %s265
        %s267 = sand.u32 %s73, 1
        %s268 = smul.addr %s267, 64
        %s269 = scalar_lea.vmem [#allocation5], %s268
        %p270 = pneg %p86
        %p271 = pneg %p83
        %p272 = pneg %p114
        %p273 = pneg %p111
        %s274 = sand.u32 %s101, 1
        %s275 = scalar_lea.sflag [#allocation4], %s274
        %s276 = sand.u32 %s101, 1
        %s277 = smul.addr %s276, 64
        %s278 = scalar_lea.vmem [#allocation7], %s277
        %p279 = pneg %p140
        %p280 = pneg %p137
        %p281 = scmp.lt.s32.totalorder %s29, 1
        %s282 = scalar_select %p281, %s29, 1
        %s283 = smul.addr %s282, 8
        %s284 = smul.addr %s283, 8
        %s285 = scalar_lea.vmem %s3, %s284
        %p286 = pneg %p166
        %p287 = pneg %p163
        %p288 = scmp.lt.s32.totalorder %s29, 1
        %s289 = scalar_select %p288, %s29, 1
        %s290 = smul.addr %s289, 8
        %s291 = smul.addr %s290, 8
        %s292 = scalar_lea.vmem %s4, %s291
        %s293 = smul.u32 2, %s30
        %s294 = smul.u32 2, %s30
        %p295 = scmp.lt.s32.totalorder %s29, 1
        %s296 = scalar_select %p295, %s29, 1
        %s297 = smul.addr %s296, 8
        %s298 = smul.addr %s297, 8
        %s299 = scalar_lea.vmem %s3, %s298
        %p300 = scmp.lt.s32.totalorder %s29, 1
        %s301 = scalar_select %p300, %s29, 1
        %s302 = smul.addr %s301, 8
        %s303 = smul.addr %s302, 8
        %s304 = scalar_lea.vmem %s4, %s303
        %v305 = vld [vmem:[%s252] sm:$0xff]
        %v306 = vld [vmem:[%s252 + $0x8] sm:$0xff]
        %v307 = vld [vmem:[%s252 + $0x10] sm:$0xff]
        %v308 = vld [vmem:[%s252 + $0x18] sm:$0xff]
        %v309 = vld [vmem:[%s252 + $0x20] sm:$0xff]
        %v310 = vld [vmem:[%s252 + $0x28] sm:$0xff]
        %v311 = vld [vmem:[%s252 + $0x30] sm:$0xff]
        %v312 = vld [vmem:[%s252 + $0x38] sm:$0xff]
        %v313 = vld [vmem:[%s242] sm:$0xff]
        %v314 = vld [vmem:[%s242 + $0x8] sm:$0xff]
        %v315 = vld [vmem:[%s242 + $0x10] sm:$0xff]
        %v316 = vld [vmem:[%s242 + $0x18] sm:$0xff]
        %v317 = vld [vmem:[%s242 + $0x20] sm:$0xff]
        %v318 = vld [vmem:[%s242 + $0x28] sm:$0xff]
        %v319 = vld [vmem:[%s242 + $0x30] sm:$0xff]
        %v320 = vld [vmem:[%s242 + $0x38] sm:$0xff]
        %v321 = vld [vmem:[%s242 + $0x40] sm:$0xff]
        %v322 = vld [vmem:[%s242 + $0x48] sm:$0xff]
        %v323 = vld [vmem:[%s242 + $0x50] sm:$0xff]
        %v324 = vld [vmem:[%s242 + $0x58] sm:$0xff]
        %v325 = vld [vmem:[%s242 + $0x60] sm:$0xff]
        %v326 = vld [vmem:[%s242 + $0x68] sm:$0xff]
        %v327 = vld [vmem:[%s242 + $0x70] sm:$0xff]
        %v328 = vld [vmem:[%s242 + $0x78] sm:$0xff]
        %v329 = vld [vmem:[%s242 + $0x80] sm:$0xff]
        %v330 = vld [vmem:[%s242 + $0x88] sm:$0xff]
        %v331 = vld [vmem:[%s242 + $0x90] sm:$0xff]
        %v332 = vld [vmem:[%s242 + $0x98] sm:$0xff]
        %v333 = vld [vmem:[%s242 + $0xa0] sm:$0xff]
        %v334 = vld [vmem:[%s242 + $0xa8] sm:$0xff]
        %v335 = vld [vmem:[%s242 + $0xb0] sm:$0xff]
        %v336 = vld [vmem:[%s242 + $0xb8] sm:$0xff]
        %v337 = vld [vmem:[%s242 + $0xc0] sm:$0xff]
        %v338 = vld [vmem:[%s242 + $0xc8] sm:$0xff]
        %v339 = vld [vmem:[%s242 + $0xd0] sm:$0xff]
        %v340 = vld [vmem:[%s242 + $0xd8] sm:$0xff]
        %v341 = vld [vmem:[%s242 + $0xe0] sm:$0xff]
        %v342 = vld [vmem:[%s242 + $0xe8] sm:$0xff]
        %v343 = vld [vmem:[%s242 + $0xf0] sm:$0xff]
        %v344 = vld [vmem:[%s242 + $0xf8] sm:$0xff]
        %v353 = vunpack.c.l.b16 %v305
        %v354 = vunpack.c.h.b16 %v305
        %v355 = vunpack.c.l.b16 %v306
        %v356 = vunpack.c.h.b16 %v306
        %v357 = vunpack.c.l.b16 %v307
        %v358 = vunpack.c.h.b16 %v307
        %v359 = vunpack.c.l.b16 %v308
        %v360 = vunpack.c.h.b16 %v308
        %v361 = vunpack.c.l.b16 %v309
        %v362 = vunpack.c.h.b16 %v309
        %v363 = vunpack.c.l.b16 %v310
        %v364 = vunpack.c.h.b16 %v310
        %v365 = vunpack.c.l.b16 %v311
        %v366 = vunpack.c.h.b16 %v311
        %v367 = vunpack.c.l.b16 %v312
        %v368 = vunpack.c.h.b16 %v312
        %v369 = vpack.c.b16 %v355, %v353
        %v370 = vpack.c.b16 %v356, %v354
        %v371 = vpack.c.b16 %v359, %v357
        %v372 = vpack.c.b16 %v360, %v358
        %v373 = vpack.c.b16 %v363, %v361
        %v374 = vpack.c.b16 %v364, %v362
        %v375 = vpack.c.b16 %v367, %v365
        %v376 = vpack.c.b16 %v368, %v366
        %v417 = vunpack.c.l.b16 %v313
        %v418 = vunpack.c.h.b16 %v313
        %v419 = vunpack.c.l.b16 %v314
        %v420 = vunpack.c.h.b16 %v314
        %v421 = vunpack.c.l.b16 %v315
        %v422 = vunpack.c.h.b16 %v315
        %v423 = vunpack.c.l.b16 %v316
        %v424 = vunpack.c.h.b16 %v316
        %v425 = vunpack.c.l.b16 %v317
        %v426 = vunpack.c.h.b16 %v317
        %v427 = vunpack.c.l.b16 %v318
        %v428 = vunpack.c.h.b16 %v318
        %v429 = vunpack.c.l.b16 %v319
        %v430 = vunpack.c.h.b16 %v319
        %v431 = vunpack.c.l.b16 %v320
        %v432 = vunpack.c.h.b16 %v320
        %v433 = vunpack.c.l.b16 %v321
        %v434 = vunpack.c.h.b16 %v321
        %v435 = vunpack.c.l.b16 %v322
        %v436 = vunpack.c.h.b16 %v322
        %v437 = vunpack.c.l.b16 %v323
        %v438 = vunpack.c.h.b16 %v323
        %v439 = vunpack.c.l.b16 %v324
        %v440 = vunpack.c.h.b16 %v324
        %v441 = vunpack.c.l.b16 %v325
        %v442 = vunpack.c.h.b16 %v325
        %v443 = vunpack.c.l.b16 %v326
        %v444 = vunpack.c.h.b16 %v326
        %v445 = vunpack.c.l.b16 %v327
        %v446 = vunpack.c.h.b16 %v327
        %v447 = vunpack.c.l.b16 %v328
        %v448 = vunpack.c.h.b16 %v328
        %v449 = vunpack.c.l.b16 %v329
        %v450 = vunpack.c.h.b16 %v329
        %v451 = vunpack.c.l.b16 %v330
        %v452 = vunpack.c.h.b16 %v330
        %v453 = vunpack.c.l.b16 %v331
        %v454 = vunpack.c.h.b16 %v331
        %v455 = vunpack.c.l.b16 %v332
        %v456 = vunpack.c.h.b16 %v332
        %v457 = vunpack.c.l.b16 %v333
        %v458 = vunpack.c.h.b16 %v333
        %v459 = vunpack.c.l.b16 %v334
        %v460 = vunpack.c.h.b16 %v334
        %v461 = vunpack.c.l.b16 %v335
        %v462 = vunpack.c.h.b16 %v335
        %v463 = vunpack.c.l.b16 %v336
        %v464 = vunpack.c.h.b16 %v336
        %v465 = vunpack.c.l.b16 %v337
        %v466 = vunpack.c.h.b16 %v337
        %v467 = vunpack.c.l.b16 %v338
        %v468 = vunpack.c.h.b16 %v338
        %v469 = vunpack.c.l.b16 %v339
        %v470 = vunpack.c.h.b16 %v339
        %v471 = vunpack.c.l.b16 %v340
        %v472 = vunpack.c.h.b16 %v340
        %v473 = vunpack.c.l.b16 %v341
        %v474 = vunpack.c.h.b16 %v341
        %v475 = vunpack.c.l.b16 %v342
        %v476 = vunpack.c.h.b16 %v342
        %v477 = vunpack.c.l.b16 %v343
        %v478 = vunpack.c.h.b16 %v343
        %v479 = vunpack.c.l.b16 %v344
        %v480 = vunpack.c.h.b16 %v344
        %v481 = vpack.c.b16 %v419, %v417
        %v482 = vpack.c.b16 %v420, %v418
        %v483 = vpack.c.b16 %v423, %v421
        %v484 = vpack.c.b16 %v424, %v422
        %v485 = vpack.c.b16 %v427, %v425
        %v486 = vpack.c.b16 %v428, %v426
        %v487 = vpack.c.b16 %v431, %v429
        %v488 = vpack.c.b16 %v432, %v430
        %v489 = vpack.c.b16 %v435, %v433
        %v490 = vpack.c.b16 %v436, %v434
        %v491 = vpack.c.b16 %v439, %v437
        %v492 = vpack.c.b16 %v440, %v438
        %v493 = vpack.c.b16 %v443, %v441
        %v494 = vpack.c.b16 %v444, %v442
        %v495 = vpack.c.b16 %v447, %v445
        %v496 = vpack.c.b16 %v448, %v446
        %v497 = vpack.c.b16 %v451, %v449
        %v498 = vpack.c.b16 %v452, %v450
        %v499 = vpack.c.b16 %v455, %v453
        %v500 = vpack.c.b16 %v456, %v454
        %v501 = vpack.c.b16 %v459, %v457
        %v502 = vpack.c.b16 %v460, %v458
        %v503 = vpack.c.b16 %v463, %v461
        %v504 = vpack.c.b16 %v464, %v462
        %v505 = vpack.c.b16 %v467, %v465
        %v506 = vpack.c.b16 %v468, %v466
        %v507 = vpack.c.b16 %v471, %v469
        %v508 = vpack.c.b16 %v472, %v470
        %v509 = vpack.c.b16 %v475, %v473
        %v510 = vpack.c.b16 %v476, %v474
        %v511 = vpack.c.b16 %v479, %v477
        %v512 = vpack.c.b16 %v480, %v478
        %545 = vmatpush.bf16.msra.mxu0 %v495
        %546 = vmatpush.bf16.msra.mxu0 %v493
        %547 = vmatpush.bf16.msra.mxu0 %v491
        %548 = vmatpush.bf16.msra.mxu0 %v489
        %549 = vmatpush.bf16.msra.mxu0 %v487
        %550 = vmatpush.bf16.msra.mxu0 %v485
        %551 = vmatpush.bf16.msra.mxu0 %v483
        %552 = vmatpush.bf16.msra.mxu0 %v481
        %553 = vmatmul.bf16.gmra.mxu0 %v369
        %v554 = vpop.f32.mrf.mxu0
        %v555 = vadd.f32 0.0, %v554
        %v556 = vpop.f32.mrf.mxu0
        %v557 = vadd.f32 0.0, %v556
        %558 = vmatmul.bf16.gmra.mxu0 %v371
        %v559 = vpop.f32.mrf.mxu0
        %v560 = vadd.f32 0.0, %v559
        %v561 = vpop.f32.mrf.mxu0
        %v562 = vadd.f32 0.0, %v561
        %563 = vmatmul.bf16.gmra.mxu0 %v373
        %v564 = vpop.f32.mrf.mxu0
        %v565 = vadd.f32 0.0, %v564
        %v566 = vpop.f32.mrf.mxu0
        %v567 = vadd.f32 0.0, %v566
        %568 = vmatmul.bf16.gmra.mxu0 %v375
        %v569 = vpop.f32.mrf.mxu0
        %v570 = vadd.f32 0.0, %v569
        %v571 = vpop.f32.mrf.mxu0
        %v572 = vadd.f32 0.0, %v571
        %573 = vdwg.mxu0
        %574 = vmatpush.bf16.msra.mxu0 %v511
        %575 = vmatpush.bf16.msra.mxu0 %v509
        %576 = vmatpush.bf16.msra.mxu0 %v507
        %577 = vmatpush.bf16.msra.mxu0 %v505
        %578 = vmatpush.bf16.msra.mxu0 %v503
        %579 = vmatpush.bf16.msra.mxu0 %v501
        %580 = vmatpush.bf16.msra.mxu0 %v499
        %581 = vmatpush.bf16.msra.mxu0 %v497
        %582 = vmatmul.bf16.gmra.mxu0 %v370
        %v583 = vpop.f32.mrf.mxu0
        %v584 = vadd.f32 %v555, %v583
        %v585 = vpop.f32.mrf.mxu0
        %v586 = vadd.f32 %v557, %v585
        %587 = vmatmul.bf16.gmra.mxu0 %v372
        %v588 = vpop.f32.mrf.mxu0
        %v589 = vadd.f32 %v560, %v588
        %v590 = vpop.f32.mrf.mxu0
        %v591 = vadd.f32 %v562, %v590
        %592 = vmatmul.bf16.gmra.mxu0 %v374
        %v593 = vpop.f32.mrf.mxu0
        %v594 = vadd.f32 %v565, %v593
        %v595 = vpop.f32.mrf.mxu0
        %v596 = vadd.f32 %v567, %v595
        %597 = vmatmul.bf16.gmra.mxu0 %v376
        %v598 = vpop.f32.mrf.mxu0
        %v599 = vadd.f32 %v570, %v598
        %v600 = vpop.f32.mrf.mxu0
        %v601 = vadd.f32 %v572, %v600
        %602 = vdwg.mxu0
        %603 = vmatpush.bf16.msra.mxu0 %v496
        %604 = vmatpush.bf16.msra.mxu0 %v494
        %605 = vmatpush.bf16.msra.mxu0 %v492
        %606 = vmatpush.bf16.msra.mxu0 %v490
        %607 = vmatpush.bf16.msra.mxu0 %v488
        %608 = vmatpush.bf16.msra.mxu0 %v486
        %609 = vmatpush.bf16.msra.mxu0 %v484
        %610 = vmatpush.bf16.msra.mxu0 %v482
        %611 = vmatmul.bf16.gmra.mxu0 %v369
        %v612 = vpop.f32.mrf.mxu0
        %v613 = vadd.f32 0.0, %v612
        %v614 = vpop.f32.mrf.mxu0
        %v615 = vadd.f32 0.0, %v614
        %616 = vmatmul.bf16.gmra.mxu0 %v371
        %v617 = vpop.f32.mrf.mxu0
        %v618 = vadd.f32 0.0, %v617
        %v619 = vpop.f32.mrf.mxu0
        %v620 = vadd.f32 0.0, %v619
        %621 = vmatmul.bf16.gmra.mxu0 %v373
        %v622 = vpop.f32.mrf.mxu0
        %v623 = vadd.f32 0.0, %v622
        %v624 = vpop.f32.mrf.mxu0
        %v625 = vadd.f32 0.0, %v624
        %626 = vmatmul.bf16.gmra.mxu0 %v375
        %v627 = vpop.f32.mrf.mxu0
        %v628 = vadd.f32 0.0, %v627
        %v629 = vpop.f32.mrf.mxu0
        %v630 = vadd.f32 0.0, %v629
        %631 = vdwg.mxu0
        %632 = vmatpush.bf16.msra.mxu0 %v512
        %633 = vmatpush.bf16.msra.mxu0 %v510
        %634 = vmatpush.bf16.msra.mxu0 %v508
        %635 = vmatpush.bf16.msra.mxu0 %v506
        %636 = vmatpush.bf16.msra.mxu0 %v504
        %637 = vmatpush.bf16.msra.mxu0 %v502
        %638 = vmatpush.bf16.msra.mxu0 %v500
        %639 = vmatpush.bf16.msra.mxu0 %v498
        %640 = vmatmul.bf16.gmra.mxu0 %v370
        %v641 = vpop.f32.mrf.mxu0
        %v642 = vadd.f32 %v613, %v641
        %v643 = vpop.f32.mrf.mxu0
        %v644 = vadd.f32 %v615, %v643
        %645 = vmatmul.bf16.gmra.mxu0 %v372
        %v646 = vpop.f32.mrf.mxu0
        %v647 = vadd.f32 %v618, %v646
        %v648 = vpop.f32.mrf.mxu0
        %v649 = vadd.f32 %v620, %v648
        %650 = vmatmul.bf16.gmra.mxu0 %v374
        %v651 = vpop.f32.mrf.mxu0
        %v652 = vadd.f32 %v623, %v651
        %v653 = vpop.f32.mrf.mxu0
        %v654 = vadd.f32 %v625, %v653
        %655 = vmatmul.bf16.gmra.mxu0 %v376
        %v656 = vpop.f32.mrf.mxu0
        %v657 = vadd.f32 %v628, %v656
        %v658 = vpop.f32.mrf.mxu0
        %v659 = vadd.f32 %v630, %v658
        %660 = vdwg.mxu0
        %v661 = vpack.c.bf16 %v642, %v584
        %v662 = vpack.c.bf16 %v644, %v586
        %v663 = vpack.c.bf16 %v647, %v589
        %v664 = vpack.c.bf16 %v649, %v591
        %v665 = vpack.c.bf16 %v652, %v594
        %v666 = vpack.c.bf16 %v654, %v596
        %v667 = vpack.c.bf16 %v657, %v599
        %v668 = vpack.c.bf16 %v659, %v601
        %669 = vst [vmem:[%s278] sm:$0xff] %v661
        %670 = vst [vmem:[%s278 + $0x8] sm:$0xff] %v662
        %671 = vst [vmem:[%s278 + $0x10] sm:$0xff] %v663
        %672 = vst [vmem:[%s278 + $0x18] sm:$0xff] %v664
        %673 = vst [vmem:[%s278 + $0x20] sm:$0xff] %v665
        %674 = vst [vmem:[%s278 + $0x28] sm:$0xff] %v666
        %675 = vst [vmem:[%s278 + $0x30] sm:$0xff] %v667
        %676 = vst [vmem:[%s278 + $0x38] sm:$0xff] %v668
        %p677 = scmp.eq.s32.totalorder %s30, 0
        // Predicated region
        $region37: #{tpu_custom_call.1} parent=27 // pred_check
          %p678 = pneg %p677
        $region38: #{tpu_custom_call.1} parent=27 // pred_check_branch
          %680 = sbr.rel (%p678) target = $region40
        $region39: #{tpu_custom_call.1} parent=27 // pred_region
          %vm681 = vcmask 7168
          %682 = vst.msk [vmem:[%s299] sm:$0xff] %vm681, 0.0
          %683 = vst.msk [vmem:[%s299 + $0x8] sm:$0xff] %vm681, 0.0
          %684 = vst.msk [vmem:[%s299 + $0x10] sm:$0xff] %vm681, 0.0
          %685 = vst.msk [vmem:[%s299 + $0x18] sm:$0xff] %vm681, 0.0
          %686 = vst.msk [vmem:[%s299 + $0x20] sm:$0xff] %vm681, 0.0
          %687 = vst.msk [vmem:[%s299 + $0x28] sm:$0xff] %vm681, 0.0
          %688 = vst.msk [vmem:[%s299 + $0x30] sm:$0xff] %vm681, 0.0
          %689 = vst.msk [vmem:[%s299 + $0x38] sm:$0xff] %vm681, 0.0
          %690 = vst.msk [vmem:[%s304] sm:$0xff] %vm681, 0.0
          %691 = vst.msk [vmem:[%s304 + $0x8] sm:$0xff] %vm681, 0.0
          %692 = vst.msk [vmem:[%s304 + $0x10] sm:$0xff] %vm681, 0.0
          %693 = vst.msk [vmem:[%s304 + $0x18] sm:$0xff] %vm681, 0.0
          %694 = vst.msk [vmem:[%s304 + $0x20] sm:$0xff] %vm681, 0.0
          %695 = vst.msk [vmem:[%s304 + $0x28] sm:$0xff] %vm681, 0.0
          %696 = vst.msk [vmem:[%s304 + $0x30] sm:$0xff] %vm681, 0.0
          %697 = vst.msk [vmem:[%s304 + $0x38] sm:$0xff] %vm681, 0.0
        $region40: #{tpu_custom_call.1} parent=27 // pred_fallthru
          _
        %v698 = vld [vmem:[%s299] sm:$0xff]
        %v699 = vld [vmem:[%s299 + $0x8] sm:$0xff]
        %v700 = vld [vmem:[%s299 + $0x10] sm:$0xff]
        %v701 = vld [vmem:[%s299 + $0x18] sm:$0xff]
        %v702 = vld [vmem:[%s299 + $0x20] sm:$0xff]
        %v703 = vld [vmem:[%s299 + $0x28] sm:$0xff]
        %v704 = vld [vmem:[%s299 + $0x30] sm:$0xff]
        %v705 = vld [vmem:[%s299 + $0x38] sm:$0xff]
        %v706 = vadd.f32 %v584, %v642
        %707 = vadd.xlane.f32.xlu0 %v706
        %v708 = vpop.xlane.xlu0 %707
        %v709 = vadd.f32 %v586, %v644
        %710 = vadd.xlane.f32.xlu0 %v709
        %v711 = vpop.xlane.xlu0 %710
        %v712 = vadd.f32 %v589, %v647
        %713 = vadd.xlane.f32.xlu0 %v712
        %v714 = vpop.xlane.xlu0 %713
        %v715 = vadd.f32 %v591, %v649
        %716 = vadd.xlane.f32.xlu0 %v715
        %v717 = vpop.xlane.xlu0 %716
        %v718 = vadd.f32 %v594, %v652
        %719 = vadd.xlane.f32.xlu0 %v718
        %v720 = vpop.xlane.xlu0 %719
        %v721 = vadd.f32 %v596, %v654
        %722 = vadd.xlane.f32.xlu0 %v721
        %v723 = vpop.xlane.xlu0 %722
        %v724 = vadd.f32 %v599, %v657
        %725 = vadd.xlane.f32.xlu0 %v724
        %v726 = vpop.xlane.xlu0 %725
        %v727 = vadd.f32 %v601, %v659
        %728 = vadd.xlane.f32.xlu0 %v727
        %v729 = vpop.xlane.xlu0 %728
        %v730 = vadd.f32 %v698, %v708
        %v731 = vadd.f32 %v699, %v711
        %v732 = vadd.f32 %v700, %v714
        %v733 = vadd.f32 %v701, %v717
        %v734 = vadd.f32 %v702, %v720
        %v735 = vadd.f32 %v703, %v723
        %v736 = vadd.f32 %v704, %v726
        %v737 = vadd.f32 %v705, %v729
        %vm738 = vcmask 7168
        %739 = vst.msk [vmem:[%s299] sm:$0xff] %vm738, %v730
        %740 = vst.msk [vmem:[%s299 + $0x8] sm:$0xff] %vm738, %v731
        %741 = vst.msk [vmem:[%s299 + $0x10] sm:$0xff] %vm738, %v732
        %742 = vst.msk [vmem:[%s299 + $0x18] sm:$0xff] %vm738, %v733
        %743 = vst.msk [vmem:[%s299 + $0x20] sm:$0xff] %vm738, %v734
        %744 = vst.msk [vmem:[%s299 + $0x28] sm:$0xff] %vm738, %v735
        %745 = vst.msk [vmem:[%s299 + $0x30] sm:$0xff] %vm738, %v736
        %746 = vst.msk [vmem:[%s299 + $0x38] sm:$0xff] %vm738, %v737
        %v747 = vld [vmem:[%s304] sm:$0xff]
        %v748 = vld [vmem:[%s304 + $0x8] sm:$0xff]
        %v749 = vld [vmem:[%s304 + $0x10] sm:$0xff]
        %v750 = vld [vmem:[%s304 + $0x18] sm:$0xff]
        %v751 = vld [vmem:[%s304 + $0x20] sm:$0xff]
        %v752 = vld [vmem:[%s304 + $0x28] sm:$0xff]
        %v753 = vld [vmem:[%s304 + $0x30] sm:$0xff]
        %v754 = vld [vmem:[%s304 + $0x38] sm:$0xff]
        %v755 = vmul.f32 %v584, %v584
        %v756 = vmul.f32 %v642, %v642
        %v757 = vmul.f32 %v586, %v586
        %v758 = vmul.f32 %v644, %v644
        %v759 = vmul.f32 %v589, %v589
        %v760 = vmul.f32 %v647, %v647
        %v761 = vmul.f32 %v591, %v591
        %v762 = vmul.f32 %v649, %v649
        %v763 = vmul.f32 %v594, %v594
        %v764 = vmul.f32 %v652, %v652
        %v765 = vmul.f32 %v596, %v596
        %v766 = vmul.f32 %v654, %v654
        %v767 = vmul.f32 %v599, %v599
        %v768 = vmul.f32 %v657, %v657
        %v769 = vmul.f32 %v601, %v601
        %v770 = vmul.f32 %v659, %v659
        %v771 = vadd.f32 %v755, %v756
        %772 = vadd.xlane.f32.xlu0 %v771
        %v773 = vpop.xlane.xlu0 %772
        %v774 = vadd.f32 %v757, %v758
        %775 = vadd.xlane.f32.xlu0 %v774
        %v776 = vpop.xlane.xlu0 %775
        %v777 = vadd.f32 %v759, %v760
        %778 = vadd.xlane.f32.xlu0 %v777
        %v779 = vpop.xlane.xlu0 %778
        %v780 = vadd.f32 %v761, %v762
        %781 = vadd.xlane.f32.xlu0 %v780
        %v782 = vpop.xlane.xlu0 %781
        %v783 = vadd.f32 %v763, %v764
        %784 = vadd.xlane.f32.xlu0 %v783
        %v785 = vpop.xlane.xlu0 %784
        %v786 = vadd.f32 %v765, %v766
        %787 = vadd.xlane.f32.xlu0 %v786
        %v788 = vpop.xlane.xlu0 %787
        %v789 = vadd.f32 %v767, %v768
        %790 = vadd.xlane.f32.xlu0 %v789
        %v791 = vpop.xlane.xlu0 %790
        %v792 = vadd.f32 %v769, %v770
        %793 = vadd.xlane.f32.xlu0 %v792
        %v794 = vpop.xlane.xlu0 %793
        %v795 = vadd.f32 %v747, %v773
        %v796 = vadd.f32 %v748, %v776
        %v797 = vadd.f32 %v749, %v779
        %v798 = vadd.f32 %v750, %v782
        %v799 = vadd.f32 %v751, %v785
        %v800 = vadd.f32 %v752, %v788
        %v801 = vadd.f32 %v753, %v791
        %v802 = vadd.f32 %v754, %v794
        %803 = vst.msk [vmem:[%s304] sm:$0xff] %vm738, %v795
        %804 = vst.msk [vmem:[%s304 + $0x8] sm:$0xff] %vm738, %v796
        %805 = vst.msk [vmem:[%s304 + $0x10] sm:$0xff] %vm738, %v797
        %806 = vst.msk [vmem:[%s304 + $0x18] sm:$0xff] %vm738, %v798
        %807 = vst.msk [vmem:[%s304 + $0x20] sm:$0xff] %vm738, %v799
        %808 = vst.msk [vmem:[%s304 + $0x28] sm:$0xff] %vm738, %v800
        %809 = vst.msk [vmem:[%s304 + $0x30] sm:$0xff] %vm738, %v801
        %810 = vst.msk [vmem:[%s304 + $0x38] sm:$0xff] %vm738, %v802
        %s811 = sand.u32 %s101, 1
        %s812 = scalar_lea.sflag [#allocation4], %s811
        %s813 = sand.u32 %s101, 1
        %s814 = smul.addr %s813, 64
        %s815 = scalar_lea.vmem [#allocation7], %s814
        %p816 = scmp.lt.s32.totalorder %s29, 1
        %s817 = scalar_select %p816, %s29, 1
        %s818 = smul.addr %s817, 8
        %s819 = smul.addr %s818, 8
        %s820 = scalar_lea.vmem %s3, %s819
        %p821 = scmp.lt.s32.totalorder %s29, 1
        %s822 = scalar_select %p821, %s29, 1
        %s823 = smul.addr %s822, 8
        %s824 = smul.addr %s823, 8
        %s825 = scalar_lea.vmem %s4, %s824
        // Predicated region
        $region41: #{tpu_custom_call.1} parent=27 // pred_check
          %p826 = pneg %p111
        $region42: #{tpu_custom_call.1} parent=27 // pred_check_branch
          %828 = sbr.rel (%p826) target = $region44
        $region43: #{tpu_custom_call.1} parent=27 // pred_region
          %s829 = smul.u32 2, %s30
          %831 = vsyncadd %s812, 0
          %s832 = smul.addr %s29, 64
          %s833 = sadd.s32 %s829, %s832
          %s834 = smul.addr %s833, 4
          %s835 = scalar_lea.hbm %s2, %s834
          %s836 = sshll.u32 %s815, 4
          %s837 = int_to_ptr.vmem [resolvable:$true] %s836
          %s838 = sshll.u32 %s835, 4
          %s839 = int_to_ptr.hbm [resolvable:$true] %s838
          %844 = dma.vmem_to_hbm [thread:$0]  %s837, 1024, %s839, %s812, 128, 512, 8
        $region44: #{tpu_custom_call.1} parent=27 // pred_fallthru
          _
        // Predicated region
        $region45: #{tpu_custom_call.1} parent=27 // pred_check
          %p845 = pneg %p137
        $region46: #{tpu_custom_call.1} parent=27 // pred_check_branch
          %847 = sbr.rel (%p845) target = $region48
        $region47: #{tpu_custom_call.1} parent=27 // pred_region
          _
        $region48: #{tpu_custom_call.1} parent=27 // pred_fallthru
          _
        // Predicated region
        $region49: #{tpu_custom_call.1} parent=27 // pred_check
          %p848 = pneg %p163
        $region50: #{tpu_custom_call.1} parent=27 // pred_check_branch
          %850 = sbr.rel (%p848) target = $region52
        $region51: #{tpu_custom_call.1} parent=27 // pred_region
          _
        $region52: #{tpu_custom_call.1} parent=27 // pred_fallthru
          _
      $region28: #{tpu_custom_call.1} parent=5 // pred_fallthru
        _
      %p851 = scmp.le.s32.totalorder 2, %s20
      // Predicated region
      $region53: #{tpu_custom_call.1} parent=5 // pred_check
        %p852 = pneg %p851
      $region54: #{tpu_custom_call.1} parent=5 // pred_check_branch
        %854 = sbr.rel (%p852) target = $region56
      $region55: #{tpu_custom_call.1} parent=5 // pred_region
        %s855 = ssub.s32 %s20, 2
        // Predicated region
        $region57: #{tpu_custom_call.1} parent=55 // pred_check
          %p856 = pneg %p117
        $region58: #{tpu_custom_call.1} parent=55 // pred_check_branch
          %858 = sbr.rel (%p856) target = $region60
        $region59: #{tpu_custom_call.1} parent=55 // pred_region
          %s859 = sand.u32 %s102, 1
          %s860 = scalar_lea.sflag [#allocation4], %s859
          %s861 = sand.u32 %s102, 1
          %s862 = smul.addr %s861, 64
          %s863 = scalar_lea.vmem [#allocation7], %s862
          %865 = dma.done %s860, 1024
        $region60: #{tpu_custom_call.1} parent=55 // pred_fallthru
          _
        // Predicated region
        $region61: #{tpu_custom_call.1} parent=55 // pred_check
          %p866 = pneg %p143
        $region62: #{tpu_custom_call.1} parent=55 // pred_check_branch
          %868 = sbr.rel (%p866) target = $region64
        $region63: #{tpu_custom_call.1} parent=55 // pred_region
          %p869 = scmp.lt.s32.totalorder %s31, 1
          %s870 = scalar_select %p869, %s31, 1
          %s871 = smul.addr %s870, 8
          %s872 = smul.addr %s871, 8
          %s873 = scalar_lea.vmem %s3, %s872
        $region64: #{tpu_custom_call.1} parent=55 // pred_fallthru
          _
        // Predicated region
        $region65: #{tpu_custom_call.1} parent=55 // pred_check
          %p874 = pneg %p169
        $region66: #{tpu_custom_call.1} parent=55 // pred_check_branch
          %876 = sbr.rel (%p874) target = $region68
        $region67: #{tpu_custom_call.1} parent=55 // pred_region
          %p877 = scmp.lt.s32.totalorder %s31, 1
          %s878 = scalar_select %p877, %s31, 1
          %s879 = smul.addr %s878, 8
          %s880 = smul.addr %s879, 8
          %s881 = scalar_lea.vmem %s4, %s880
        $region68: #{tpu_custom_call.1} parent=55 // pred_fallthru
          _
      $region56: #{tpu_custom_call.1} parent=5 // pred_fallthru
        _
    $region6: #{tpu_custom_call.1} parent=1 // loop_footer
      %s24 = sadd.s32 1, %s20
    $region7: #{tpu_custom_call.1} parent=1 // loop_footer_branch
      %19 = sbr.rel target = $region3
    $region8: #{tpu_custom_call.1} parent=1 // loop_exit
      _
    %882 = vsyncpa [#allocation3], 1
    %s883 = scalar_lea.sflag [#allocation3], 1
    %884 = vsyncpa %s883, 1
    %885 = vsyncpa [#allocation6], 1
    %s886 = scalar_lea.sflag [#allocation6], 1
    %887 = vsyncpa %s886, 1
    %888 = vsyncpa [#allocation4], 1
    %s889 = scalar_lea.sflag [#allocation4], 1
    %890 = vsyncpa %s889, 1

</llo_original>
